<compile_context>
chip_gen: v5e
topology: v5e:2x2
jax: 0.10.0
libtpu: 0.0.40
codegen_flags: <defaults>
</compile_context>

<pallas_src>
import functools

import jax
import jax.numpy as jnp
from jax.experimental import pallas as pl
from jax.experimental.pallas import tpu as pltpu


def mha_kernel(zq_ref, z_ref, wqt_ref, wkvt_ref, wot_ref, out_ref,
               *, n_head, head_dim):
    # zq_ref  : (TB, Q, E)      queries input block
    # z_ref   : (TB, S, E)      keys/values input block
    # wqt_ref : (E, H*E)        q_proj weight, pre-transposed to (in, out)
    # wkvt_ref: (E, 2*H*E)      [k_proj | v_proj] weights, pre-transposed+fused
    # wot_ref : (H*E, n_out)    o_proj weight, pre-transposed
    # out_ref : (TB*Q, n_out)   2-D lane/sublane-dense output block
    TB, Q, E = zq_ref.shape
    S = z_ref.shape[1]
    HE = n_head * head_dim

    # Fold the batch block into the row dimension so each projection is a
    # single multi-row MXU matmul (no per-batch GEMVs).
    zq = zq_ref[...].reshape(TB * Q, E)          # (TB*Q, E)
    z = z_ref[...].reshape(TB * S, E)            # (TB*S, E)

    # Projections.  Scale (n_embd ** -0.5 from the module) applied once to q
    # (mathematically identical to scaling the scores).  K and V come out of
    # ONE fused 256-wide matmul; the split at lane HE=128 is lane-group aligned.
    scale = head_dim ** (-0.5)
    q = jnp.dot(zq, wqt_ref[...], preferred_element_type=jnp.float32) * scale  # (TB*Q, HE)
    kv = jnp.dot(z, wkvt_ref[...], preferred_element_type=jnp.float32)         # (TB*S, 2*HE)

    q3 = q.reshape(TB, Q, HE)
    k3 = kv[:, :HE].reshape(TB, S, HE)
    v3 = kv[:, HE:].reshape(TB, S, HE)

    # Attention, vectorized over the batch; static loop only over the H=4 heads.
    ctx_heads = []
    for h in range(n_head):
        lo, hi = h * head_dim, (h + 1) * head_dim
        qh = q3[:, :, lo:hi]                                  # (TB, Q, Eh)
        kh = k3[:, :, lo:hi]                                  # (TB, S, Eh)
        vh = v3[:, :, lo:hi]                                  # (TB, S, Eh)
        s = jnp.einsum("bqe,bke->bqk", qh, kh,
                       preferred_element_type=jnp.float32)    # (TB, Q, S)
        # One softmax over the whole (TB, Q, S) slab; exact division.
        s = s - jnp.max(s, axis=-1, keepdims=True)
        p = jnp.exp(s)
        p = p / jnp.sum(p, axis=-1, keepdims=True)
        ctx_heads.append(jnp.einsum("bqk,bke->bqe", p, vh,
                                    preferred_element_type=jnp.float32))
    # Pack heads into a lane-dense (TB*Q, H*E) tile; single fused output
    # projection whose contraction dim (H*E = 128) fills a full lane group.
    ctx = jnp.concatenate(ctx_heads, axis=-1).reshape(TB * Q, HE)
    out = jnp.dot(ctx, wot_ref[...], preferred_element_type=jnp.float32)       # (TB*Q, n_out)
    out_ref[...] = out.astype(out_ref.dtype)


def multi_head_attention(z_q, z, wq, wk, wv, wo, *, n_head, n_embd,
                         batch_block=None):
    B, Q, E = z_q.shape
    Bz, S, Ez = z.shape
    assert B == Bz and E == n_embd and Ez == n_embd
    n_out = wo.shape[0]
    HE = n_head * n_embd

    # Default: collapse the grid to a single step (TB = B).  At these sizes the
    # whole problem is a few KiB; multiple grid steps are pure per-step
    # overhead on v5e/v6e (1 TC) and not worth the split on v7x either.
    TB = B if batch_block is None else batch_block
    assert B % TB == 0, "batch must be divisible by batch_block"
    # Keep the 2-D output block tiling-legal if a smaller batch_block is used.
    assert TB == B or (TB * Q) % 8 == 0, "TB*Q must be a multiple of 8 (or TB == B)"

    # Wrapper-side weight prep (free layout plumbing in XLA):
    #  * pre-transpose all projection weights to (in, out) -> no in-kernel
    #    transposes,
    #  * fuse k_proj and v_proj into one (E, 2*H*E) weight -> single 256-wide
    #    projection matmul in the kernel.
    wq_t = wq.T                                       # (E, HE)
    wkv_t = jnp.concatenate([wk.T, wv.T], axis=1)     # (E, 2*HE)
    wo_t = wo.T                                       # (HE, n_out)

    kernel = functools.partial(mha_kernel, n_head=n_head, head_dim=n_embd)
    out2d = pl.pallas_call(
        kernel,
        out_shape=jax.ShapeDtypeStruct((B * Q, n_out), z_q.dtype),
        grid_spec=pltpu.PrefetchScalarGridSpec(
            num_scalar_prefetch=0,
            grid=(B // TB,),
            in_specs=[
                pl.BlockSpec((TB, Q, E), lambda i: (i, 0, 0)),
                pl.BlockSpec((TB, S, E), lambda i: (i, 0, 0)),
                pl.BlockSpec((E, HE), lambda i: (0, 0)),
                pl.BlockSpec((E, 2 * HE), lambda i: (0, 0)),
                pl.BlockSpec((HE, n_out), lambda i: (0, 0)),
            ],
            out_specs=pl.BlockSpec((TB * Q, n_out), lambda i: (i, 0)),
        ),
        compiler_params=pltpu.CompilerParams(
            dimension_semantics=("parallel",)),
    )(z_q, z, wq_t, wkv_t, wo_t)
    return out2d.reshape(B, Q, n_out)


def reference_mha(z_q, z, wq, wk, wv, wo, *, n_head, n_embd):
    # Pure-JAX reference mirroring the PyTorch forward exactly (bias=False).
    # Highest precision so the comparison is against accurate f32 matmuls.
    hp = jax.lax.Precision.HIGHEST
    B, Q, _ = z_q.shape
    S = z.shape[1]
    q = jnp.einsum("bqe,fe->bqf", z_q, wq, precision=hp)
    k = jnp.einsum("bse,fe->bsf", z, wk, precision=hp)
    v = jnp.einsum("bse,fe->bsf", z, wv, precision=hp)
    q = q.reshape(B, Q, n_head, n_embd).transpose(0, 2, 1, 3)
    k = k.reshape(B, S, n_head, n_embd).transpose(0, 2, 1, 3)
    v = v.reshape(B, S, n_head, n_embd).transpose(0, 2, 1, 3)
    attn = jnp.einsum("bhqe,bhke->bhqk", q, k, precision=hp) * n_embd ** (-0.5)
    attn = jax.nn.softmax(attn, axis=-1)
    out = jnp.einsum("bhqk,bhke->bhqe", attn, v, precision=hp)
    out = out.transpose(0, 2, 1, 3).reshape(B, Q, n_head * n_embd)
    return jnp.einsum("bqf,of->bqo", out, wo, precision=hp)


if __name__ == "__main__":
    n_embd, n_head = 32, 4
    n_out = n_embd  # module default: n_out=None -> n_embd

    def make_inputs(key, B, S):
        k1, k2, k3, k4, k5, k6 = jax.random.split(key, 6)
        lim_in = 1.0 / float(n_embd) ** 0.5
        lim_o = 1.0 / float(n_embd * n_head) ** 0.5
        wq = jax.random.uniform(k1, (n_head * n_embd, n_embd), jnp.float32, -lim_in, lim_in)
        wk = jax.random.uniform(k2, (n_head * n_embd, n_embd), jnp.float32, -lim_in, lim_in)
        wv = jax.random.uniform(k3, (n_head * n_embd, n_embd), jnp.float32, -lim_in, lim_in)
        wo = jax.random.uniform(k4, (n_out, n_head * n_embd), jnp.float32, -lim_o, lim_o)
        z_q = jax.random.normal(k5, (B, 1, n_embd), jnp.float32)
        z = jax.random.normal(k6, (B, S, n_embd), jnp.float32)
        return z_q, z, wq, wk, wv, wo

    root = jax.random.PRNGKey(0)
    k_a, k_b = jax.random.split(root)

    # Tolerance note: the reference uses HIGHEST-precision matmuls; the kernel
    # (and/or interpret-mode fallback) may use TPU default-precision f32 dots
    # (bf16 MXU passes, ~1e-3 worst-case abs error at these magnitudes).  5e-3
    # comfortably absorbs that while still catching any real indexing bug
    # (those produce O(0.1) errors).
    atol = rtol = 5e-3

    # Case 1: module-default shapes (batch=2, q_len=1, seq_len=8) -> grid=(1,).
    z_q, z, wq, wk, wv, wo = make_inputs(k_a, 2, 8)
    out = multi_head_attention(z_q, z, wq, wk, wv, wo, n_head=n_head, n_embd=n_embd)
    out = jax.block_until_ready(out)
    ref = reference_mha(z_q, z, wq, wk, wv, wo, n_head=n_head, n_embd=n_embd)
    assert out.shape == (2, 1, n_out)
    assert jnp.allclose(out, ref, atol=atol, rtol=rtol), \
        f"max abs err {jnp.max(jnp.abs(out - ref))}"

    # Case 2: larger batch, still one grid step (TB = B = 8, full sublane group).
    z_q, z, wq, wk, wv, wo = make_inputs(k_b, 8, 8)
    out = multi_head_attention(z_q, z, wq, wk, wv, wo, n_head=n_head, n_embd=n_embd)
    out = jax.block_until_ready(out)
    ref = reference_mha(z_q, z, wq, wk, wv, wo, n_head=n_head, n_embd=n_embd)
    assert out.shape == (8, 1, n_out)
    assert jnp.allclose(out, ref, atol=atol, rtol=rtol), \
        f"max abs err {jnp.max(jnp.abs(out - ref))}"

    print("KERNEL_OK")
</pallas_src>

<mosaic_0001>
module attributes {stable_mosaic.version = 11 : i64} {
  func.func @mha_kernel(%arg0: i32, %arg1: memref<2x1x32xf32, #tpu.memory_space<vmem>>, %arg2: memref<2x8x32xf32, #tpu.memory_space<vmem>>, %arg3: memref<32x128xf32, #tpu.memory_space<vmem>>, %arg4: memref<32x256xf32, #tpu.memory_space<vmem>>, %arg5: memref<128x32xf32, #tpu.memory_space<vmem>>, %arg6: memref<2x32xf32, #tpu.memory_space<vmem>>) attributes {dimension_semantics = [#tpu.dimension_semantics<parallel>], iteration_bounds = array<i64: 1>, scalar_prefetch = 0 : i64, scratch_operands = 0 : i64, tpu.core_type = #tpu.core_type<tc>, window_params = [{transform_indices = @transform_0, window_bounds = array<i64: 2, 1, 32>}, {transform_indices = @transform_1, window_bounds = array<i64: 2, 8, 32>}, {pipeline_mode = #tpu.pipeline_mode<synchronous>, transform_indices = @transform_2, window_bounds = array<i64: 32, 128>}, {pipeline_mode = #tpu.pipeline_mode<synchronous>, transform_indices = @transform_3, window_bounds = array<i64: 32, 256>}, {pipeline_mode = #tpu.pipeline_mode<synchronous>, transform_indices = @transform_4, window_bounds = array<i64: 128, 32>}, {transform_indices = @transform_5, window_bounds = array<i64: 2, 32>}]} {
    %c0 = arith.constant 0 : index
    %c0_0 = arith.constant 0 : index
    %c0_1 = arith.constant 0 : index
    %0 = vector.load %arg1[%c0, %c0_0, %c0_1] : memref<2x1x32xf32, #tpu.memory_space<vmem>>, vector<2x1x32xf32>
    %1 = vector.shape_cast %0 : vector<2x1x32xf32> to vector<2x32xf32>
    %c0_2 = arith.constant 0 : index
    %c0_3 = arith.constant 0 : index
    %c0_4 = arith.constant 0 : index
    %2 = vector.load %arg2[%c0_2, %c0_3, %c0_4] : memref<2x8x32xf32, #tpu.memory_space<vmem>>, vector<2x8x32xf32>
    %3 = vector.shape_cast %2 : vector<2x8x32xf32> to vector<16x32xf32>
    %c0_5 = arith.constant 0 : index
    %c0_6 = arith.constant 0 : index
    %4 = vector.load %arg3[%c0_5, %c0_6] : memref<32x128xf32, #tpu.memory_space<vmem>>, vector<32x128xf32>
    %cst = arith.constant dense<0.000000e+00> : vector<2x128xf32>
    %5 = tpu.matmul %1, %4, %cst {dimension_numbers = #tpu.dot_dimension_numbers<[1], [0], [0], [1], [0, 0, 1, 1], [], []>} : vector<2x32xf32>, vector<32x128xf32>, vector<2x128xf32> -> vector<2x128xf32>
    %cst_7 = arith.constant 0.176776692 : f32
    %6 = vector.broadcast %cst_7 : f32 to vector<2x128xf32>
    %7 = arith.mulf %5, %6 : vector<2x128xf32>
    %c0_8 = arith.constant 0 : index
    %c0_9 = arith.constant 0 : index
    %8 = vector.load %arg4[%c0_8, %c0_9] : memref<32x256xf32, #tpu.memory_space<vmem>>, vector<32x256xf32>
    %cst_10 = arith.constant dense<0.000000e+00> : vector<16x256xf32>
    %9 = tpu.matmul %3, %8, %cst_10 {dimension_numbers = #tpu.dot_dimension_numbers<[1], [0], [0], [1], [0, 0, 1, 1], [], []>} : vector<16x32xf32>, vector<32x256xf32>, vector<16x256xf32> -> vector<16x256xf32>
    %10 = vector.shape_cast %7 : vector<2x128xf32> to vector<2x1x128xf32>
    %11 = vector.extract_strided_slice %9 {offsets = [0, 0], sizes = [16, 128], strides = [1, 1]} : vector<16x256xf32> to vector<16x128xf32>
    %12 = vector.shape_cast %11 : vector<16x128xf32> to vector<2x8x128xf32>
    %13 = vector.extract_strided_slice %9 {offsets = [0, 128], sizes = [16, 128], strides = [1, 1]} : vector<16x256xf32> to vector<16x128xf32>
    %14 = vector.shape_cast %13 : vector<16x128xf32> to vector<2x8x128xf32>
    %15 = vector.extract_strided_slice %10 {offsets = [0, 0, 0], sizes = [2, 1, 32], strides = [1, 1, 1]} : vector<2x1x128xf32> to vector<2x1x32xf32>
    %16 = vector.extract_strided_slice %12 {offsets = [0, 0, 0], sizes = [2, 8, 32], strides = [1, 1, 1]} : vector<2x8x128xf32> to vector<2x8x32xf32>
    %17 = vector.extract_strided_slice %14 {offsets = [0, 0, 0], sizes = [2, 8, 32], strides = [1, 1, 1]} : vector<2x8x128xf32> to vector<2x8x32xf32>
    "tpu.trace_start"() <{level = 10 : i32, message = "bqe,bke->bqk"}> : () -> ()
    %cst_11 = arith.constant dense<0.000000e+00> : vector<2x1x8xf32>
    %18 = tpu.matmul %15, %16, %cst_11 {dimension_numbers = #tpu.dot_dimension_numbers<[2], [2], [1], [1], [0, 0, 0, 1, 1, 1], [0], [0]>} : vector<2x1x32xf32>, vector<2x8x32xf32>, vector<2x1x8xf32> -> vector<2x1x8xf32>
    "tpu.trace_stop"() : () -> ()
    %cst_12 = arith.constant dense<0xFF800000> : vector<2x1xf32>
    %19 = vector.multi_reduction <maximumf>, %18, %cst_12 [2] : vector<2x1x8xf32> to vector<2x1xf32>
    %20 = vector.shape_cast %19 : vector<2x1xf32> to vector<2x1x1xf32>
    %21 = vector.broadcast %20 : vector<2x1x1xf32> to vector<2x1x8xf32>
    %22 = arith.subf %18, %21 : vector<2x1x8xf32>
    %23 = math.exp %22 : vector<2x1x8xf32>
    %cst_13 = arith.constant dense<0.000000e+00> : vector<2x1xf32>
    %24 = vector.multi_reduction <add>, %23, %cst_13 [2] : vector<2x1x8xf32> to vector<2x1xf32>
    %25 = vector.shape_cast %24 : vector<2x1xf32> to vector<2x1x1xf32>
    %26 = vector.broadcast %25 : vector<2x1x1xf32> to vector<2x1x8xf32>
    %27 = arith.divf %23, %26 : vector<2x1x8xf32>
    "tpu.trace_start"() <{level = 10 : i32, message = "bqk,bke->bqe"}> : () -> ()
    %cst_14 = arith.constant dense<0.000000e+00> : vector<2x1x32xf32>
    %28 = tpu.matmul %27, %17, %cst_14 {dimension_numbers = #tpu.dot_dimension_numbers<[2], [1], [1], [2], [0, 0, 0, 1, 1, 2], [0], [0]>} : vector<2x1x8xf32>, vector<2x8x32xf32>, vector<2x1x32xf32> -> vector<2x1x32xf32>
    "tpu.trace_stop"() : () -> ()
    %29 = vector.extract_strided_slice %10 {offsets = [0, 0, 32], sizes = [2, 1, 32], strides = [1, 1, 1]} : vector<2x1x128xf32> to vector<2x1x32xf32>
    %30 = vector.extract_strided_slice %12 {offsets = [0, 0, 32], sizes = [2, 8, 32], strides = [1, 1, 1]} : vector<2x8x128xf32> to vector<2x8x32xf32>
    %31 = vector.extract_strided_slice %14 {offsets = [0, 0, 32], sizes = [2, 8, 32], strides = [1, 1, 1]} : vector<2x8x128xf32> to vector<2x8x32xf32>
    "tpu.trace_start"() <{level = 10 : i32, message = "bqe,bke->bqk"}> : () -> ()
    %cst_15 = arith.constant dense<0.000000e+00> : vector<2x1x8xf32>
    %32 = tpu.matmul %29, %30, %cst_15 {dimension_numbers = #tpu.dot_dimension_numbers<[2], [2], [1], [1], [0, 0, 0, 1, 1, 1], [0], [0]>} : vector<2x1x32xf32>, vector<2x8x32xf32>, vector<2x1x8xf32> -> vector<2x1x8xf32>
    "tpu.trace_stop"() : () -> ()
    %cst_16 = arith.constant dense<0xFF800000> : vector<2x1xf32>
    %33 = vector.multi_reduction <maximumf>, %32, %cst_16 [2] : vector<2x1x8xf32> to vector<2x1xf32>
    %34 = vector.shape_cast %33 : vector<2x1xf32> to vector<2x1x1xf32>
    %35 = vector.broadcast %34 : vector<2x1x1xf32> to vector<2x1x8xf32>
    %36 = arith.subf %32, %35 : vector<2x1x8xf32>
    %37 = math.exp %36 : vector<2x1x8xf32>
    %cst_17 = arith.constant dense<0.000000e+00> : vector<2x1xf32>
    %38 = vector.multi_reduction <add>, %37, %cst_17 [2] : vector<2x1x8xf32> to vector<2x1xf32>
    %39 = vector.shape_cast %38 : vector<2x1xf32> to vector<2x1x1xf32>
    %40 = vector.broadcast %39 : vector<2x1x1xf32> to vector<2x1x8xf32>
    %41 = arith.divf %37, %40 : vector<2x1x8xf32>
    "tpu.trace_start"() <{level = 10 : i32, message = "bqk,bke->bqe"}> : () -> ()
    %cst_18 = arith.constant dense<0.000000e+00> : vector<2x1x32xf32>
    %42 = tpu.matmul %41, %31, %cst_18 {dimension_numbers = #tpu.dot_dimension_numbers<[2], [1], [1], [2], [0, 0, 0, 1, 1, 2], [0], [0]>} : vector<2x1x8xf32>, vector<2x8x32xf32>, vector<2x1x32xf32> -> vector<2x1x32xf32>
    "tpu.trace_stop"() : () -> ()
    %43 = vector.extract_strided_slice %10 {offsets = [0, 0, 64], sizes = [2, 1, 32], strides = [1, 1, 1]} : vector<2x1x128xf32> to vector<2x1x32xf32>
    %44 = vector.extract_strided_slice %12 {offsets = [0, 0, 64], sizes = [2, 8, 32], strides = [1, 1, 1]} : vector<2x8x128xf32> to vector<2x8x32xf32>
    %45 = vector.extract_strided_slice %14 {offsets = [0, 0, 64], sizes = [2, 8, 32], strides = [1, 1, 1]} : vector<2x8x128xf32> to vector<2x8x32xf32>
    "tpu.trace_start"() <{level = 10 : i32, message = "bqe,bke->bqk"}> : () -> ()
    %cst_19 = arith.constant dense<0.000000e+00> : vector<2x1x8xf32>
    %46 = tpu.matmul %43, %44, %cst_19 {dimension_numbers = #tpu.dot_dimension_numbers<[2], [2], [1], [1], [0, 0, 0, 1, 1, 1], [0], [0]>} : vector<2x1x32xf32>, vector<2x8x32xf32>, vector<2x1x8xf32> -> vector<2x1x8xf32>
    "tpu.trace_stop"() : () -> ()
    %cst_20 = arith.constant dense<0xFF800000> : vector<2x1xf32>
    %47 = vector.multi_reduction <maximumf>, %46, %cst_20 [2] : vector<2x1x8xf32> to vector<2x1xf32>
    %48 = vector.shape_cast %47 : vector<2x1xf32> to vector<2x1x1xf32>
    %49 = vector.broadcast %48 : vector<2x1x1xf32> to vector<2x1x8xf32>
    %50 = arith.subf %46, %49 : vector<2x1x8xf32>
    %51 = math.exp %50 : vector<2x1x8xf32>
    %cst_21 = arith.constant dense<0.000000e+00> : vector<2x1xf32>
    %52 = vector.multi_reduction <add>, %51, %cst_21 [2] : vector<2x1x8xf32> to vector<2x1xf32>
    %53 = vector.shape_cast %52 : vector<2x1xf32> to vector<2x1x1xf32>
    %54 = vector.broadcast %53 : vector<2x1x1xf32> to vector<2x1x8xf32>
    %55 = arith.divf %51, %54 : vector<2x1x8xf32>
    "tpu.trace_start"() <{level = 10 : i32, message = "bqk,bke->bqe"}> : () -> ()
    %cst_22 = arith.constant dense<0.000000e+00> : vector<2x1x32xf32>
    %56 = tpu.matmul %55, %45, %cst_22 {dimension_numbers = #tpu.dot_dimension_numbers<[2], [1], [1], [2], [0, 0, 0, 1, 1, 2], [0], [0]>} : vector<2x1x8xf32>, vector<2x8x32xf32>, vector<2x1x32xf32> -> vector<2x1x32xf32>
    "tpu.trace_stop"() : () -> ()
    %57 = vector.extract_strided_slice %10 {offsets = [0, 0, 96], sizes = [2, 1, 32], strides = [1, 1, 1]} : vector<2x1x128xf32> to vector<2x1x32xf32>
    %58 = vector.extract_strided_slice %12 {offsets = [0, 0, 96], sizes = [2, 8, 32], strides = [1, 1, 1]} : vector<2x8x128xf32> to vector<2x8x32xf32>
    %59 = vector.extract_strided_slice %14 {offsets = [0, 0, 96], sizes = [2, 8, 32], strides = [1, 1, 1]} : vector<2x8x128xf32> to vector<2x8x32xf32>
    "tpu.trace_start"() <{level = 10 : i32, message = "bqe,bke->bqk"}> : () -> ()
    %cst_23 = arith.constant dense<0.000000e+00> : vector<2x1x8xf32>
    %60 = tpu.matmul %57, %58, %cst_23 {dimension_numbers = #tpu.dot_dimension_numbers<[2], [2], [1], [1], [0, 0, 0, 1, 1, 1], [0], [0]>} : vector<2x1x32xf32>, vector<2x8x32xf32>, vector<2x1x8xf32> -> vector<2x1x8xf32>
    "tpu.trace_stop"() : () -> ()
    %cst_24 = arith.constant dense<0xFF800000> : vector<2x1xf32>
    %61 = vector.multi_reduction <maximumf>, %60, %cst_24 [2] : vector<2x1x8xf32> to vector<2x1xf32>
    %62 = vector.shape_cast %61 : vector<2x1xf32> to vector<2x1x1xf32>
    %63 = vector.broadcast %62 : vector<2x1x1xf32> to vector<2x1x8xf32>
    %64 = arith.subf %60, %63 : vector<2x1x8xf32>
    %65 = math.exp %64 : vector<2x1x8xf32>
    %cst_25 = arith.constant dense<0.000000e+00> : vector<2x1xf32>
    %66 = vector.multi_reduction <add>, %65, %cst_25 [2] : vector<2x1x8xf32> to vector<2x1xf32>
    %67 = vector.shape_cast %66 : vector<2x1xf32> to vector<2x1x1xf32>
    %68 = vector.broadcast %67 : vector<2x1x1xf32> to vector<2x1x8xf32>
    %69 = arith.divf %65, %68 : vector<2x1x8xf32>
    "tpu.trace_start"() <{level = 10 : i32, message = "bqk,bke->bqe"}> : () -> ()
    %cst_26 = arith.constant dense<0.000000e+00> : vector<2x1x32xf32>
    %70 = tpu.matmul %69, %59, %cst_26 {dimension_numbers = #tpu.dot_dimension_numbers<[2], [1], [1], [2], [0, 0, 0, 1, 1, 2], [0], [0]>} : vector<2x1x8xf32>, vector<2x8x32xf32>, vector<2x1x32xf32> -> vector<2x1x32xf32>
    "tpu.trace_stop"() : () -> ()
    %71 = tpu.concatenate %28, %42, %56, %70 in 2 : vector<2x1x32xf32>, vector<2x1x32xf32>, vector<2x1x32xf32>, vector<2x1x32xf32> -> vector<2x1x128xf32>
    %72 = vector.shape_cast %71 : vector<2x1x128xf32> to vector<2x128xf32>
    %c0_27 = arith.constant 0 : index
    %c0_28 = arith.constant 0 : index
    %73 = vector.load %arg5[%c0_27, %c0_28] : memref<128x32xf32, #tpu.memory_space<vmem>>, vector<128x32xf32>
    %cst_29 = arith.constant dense<0.000000e+00> : vector<2x32xf32>
    %74 = tpu.matmul %72, %73, %cst_29 {dimension_numbers = #tpu.dot_dimension_numbers<[1], [0], [0], [1], [0, 0, 1, 1], [], []>} : vector<2x128xf32>, vector<128x32xf32>, vector<2x32xf32> -> vector<2x32xf32>
    %c0_30 = arith.constant 0 : index
    %c0_31 = arith.constant 0 : index
    %75 = vector.load %arg6[%c0_30, %c0_31] : memref<2x32xf32, #tpu.memory_space<vmem>>, vector<2x32xf32>
    tpu.vector_store %arg6[%c0_30, %c0_31], %74 {strides = array<i32>} : memref<2x32xf32, #tpu.memory_space<vmem>>, vector<2x32xf32>,
    return
  }
  func.func @transform_0(%arg0: i32) -> (i32, i32, i32) {
    %c0_i32 = arith.constant 0 : i32
    %c0_i32_0 = arith.constant 0 : i32
    %c0_i32_1 = arith.constant 0 : i32
    return %arg0, %c0_i32, %c0_i32_0 : i32, i32, i32
  }
  func.func @transform_1(%arg0: i32) -> (i32, i32, i32) {
    %c0_i32 = arith.constant 0 : i32
    %c0_i32_0 = arith.constant 0 : i32
    %c0_i32_1 = arith.constant 0 : i32
    return %arg0, %c0_i32, %c0_i32_0 : i32, i32, i32
  }
  func.func @transform_2(%arg0: i32) -> (i32, i32) {
    %c0_i32 = arith.constant 0 : i32
    %c0_i32_0 = arith.constant 0 : i32
    %c0_i32_1 = arith.constant 0 : i32
    return %c0_i32, %c0_i32_0 : i32, i32
  }
  func.func @transform_3(%arg0: i32) -> (i32, i32) {
    %c0_i32 = arith.constant 0 : i32
    %c0_i32_0 = arith.constant 0 : i32
    %c0_i32_1 = arith.constant 0 : i32
    return %c0_i32, %c0_i32_0 : i32, i32
  }
  func.func @transform_4(%arg0: i32) -> (i32, i32) {
    %c0_i32 = arith.constant 0 : i32
    %c0_i32_0 = arith.constant 0 : i32
    %c0_i32_1 = arith.constant 0 : i32
    return %c0_i32, %c0_i32_0 : i32, i32
  }
  func.func @transform_5(%arg0: i32) -> (i32, i32) {
    %c0_i32 = arith.constant 0 : i32
    %c0_i32_0 = arith.constant 0 : i32
    return %arg0, %c0_i32 : i32, i32
  }
}

</mosaic_0001>

<llo_original>
// kernel: tpu_custom_call.1
$region0: #{tpu_custom_call.1}
  #allocation0 [shape = 'u32[]', space=smem, size = 0x4, offset = 0x4, fixed_abs, tag = 'smem constant byte address 0x4 - core index']
  #allocation1 [shape = 'u32[72,128]{1,0:T(1,128)}', space=vmem, size = 0x9000, scoped, tag = 'internal scratch']
  %s0 = inlined_call_operand.vmem [shape: f32[2,1,32], index: 0, kind: input, shape index: {}]
  %s1 = inlined_call_operand.vmem [shape: f32[2,8,32], index: 1, kind: input, shape index: {}]
  %s2 = inlined_call_operand.vmem [shape: f32[32,128], index: 2, kind: input, shape index: {}]
  %s3 = inlined_call_operand.vmem [shape: f32[32,256], index: 3, kind: input, shape index: {}]
  %s4 = inlined_call_operand.vmem [shape: f32[128,32], index: 4, kind: input, shape index: {}]
  %s5 = inlined_call_operand.hbm [shape: f32[2,32], index: 5, kind: output, shape index: {}]
  %s6 = sld [smem:[#allocation0]]
  $region30: #{tpu_custom_call.1} parent=0
    _
  %s8 = ssub.s32 1, %s6
  %s9 = scalar_select 0, %s8, %s6
  $region1: #{tpu_custom_call.1} parent=0
    #allocation2 [shape = 'u8[1024]{0}', space=vmem, size = 0x400, scoped, tag = 'output window, operand 0, single buffered']
    #allocation3 [shape = 's32[1]{0}', space=sflag, size = 0x4, scoped, tag = 'scoped memory for tpu_custom_call.1']
    %10 = vsyncpa [#allocation3], 0
    // Predicated region
    $region2: #{tpu_custom_call.1} parent=1 // pred_check
      _
    $region3: #{tpu_custom_call.1} parent=1 // pred_check_branch
      %12 = sbr.rel (0) target = $region5
    $region4: #{tpu_custom_call.1} parent=1 // pred_region
      _
    $region5: #{tpu_custom_call.1} parent=1 // pred_fallthru
      _
    // Predicated region
    $region6: #{tpu_custom_call.1} parent=1 // pred_check
      _
    $region7: #{tpu_custom_call.1} parent=1 // pred_check_branch
      %14 = sbr.rel (0) target = $region9
    $region8: #{tpu_custom_call.1} parent=1 // pred_region
      _
    $region9: #{tpu_custom_call.1} parent=1 // pred_fallthru
      _
    // Predicated region
    $region10: #{tpu_custom_call.1} parent=1 // pred_check
      _
    $region11: #{tpu_custom_call.1} parent=1 // pred_check_branch
      %16 = sbr.rel (0) target = $region13
    $region12: #{tpu_custom_call.1} parent=1 // pred_region
      _
    $region13: #{tpu_custom_call.1} parent=1 // pred_fallthru
      _
    // Predicated region
    $region14: #{tpu_custom_call.1} parent=1 // pred_check
      _
    $region15: #{tpu_custom_call.1} parent=1 // pred_check_branch
      %18 = sbr.rel (0) target = $region17
    $region16: #{tpu_custom_call.1} parent=1 // pred_region
      _
    $region17: #{tpu_custom_call.1} parent=1 // pred_fallthru
      _
    // Predicated region
    $region18: #{tpu_custom_call.1} parent=1 // pred_check
      _
    $region19: #{tpu_custom_call.1} parent=1 // pred_check_branch
      %20 = sbr.rel (0) target = $region21
    $region20: #{tpu_custom_call.1} parent=1 // pred_region
      _
    $region21: #{tpu_custom_call.1} parent=1 // pred_fallthru
      _
    %v21 = vld [vmem:[%s0] sm:$0x1]
    %v22 = vld [vmem:[%s0 + $0x1] sm:$0x1]
    %v23 = vld [vmem:[%s1] sm:$0xff]
    %v24 = vld [vmem:[%s1 + $0x8] sm:$0xff]
    %v25 = vld [vmem:[%s2] sm:$0xff]
    %v26 = vld [vmem:[%s2 + $0x8] sm:$0xff]
    %v27 = vld [vmem:[%s2 + $0x10] sm:$0xff]
    %v28 = vld [vmem:[%s2 + $0x18] sm:$0xff]
    %31 = vst [vmem:[#allocation1] ss:$9 sm:$0xff] %v21
    %s32 = scalar_lea.vmem [#allocation1], 1
    %33 = vst [vmem:[%s32] ss:$9 sm:$0xff] %v22
    %v34 = vld [vmem:[#allocation1] sm:$0xff]
    %vm35 = vcmask 261120
    %v36 = vsel %vm35, %v34, 0
    %38 = vmatpush.msra.mxu0 0.0
    %39 = vmatpush.msra.mxu0 0.0
    %40 = vmatpush.msra.mxu0 0.0
    %41 = vmatpush.msra.mxu0 0.0
    %42 = vmatpush.msra.mxu0 0.0
    %43 = vmatpush.msra.mxu0 0.0
    %44 = vmatpush.msra.mxu0 0.0
    %45 = vmatpush.msra.mxu0 0.0
    %46 = vmatpush.msra.mxu0 0.0
    %47 = vmatpush.msra.mxu0 0.0
    %48 = vmatpush.msra.mxu0 0.0
    %49 = vmatpush.msra.mxu0 0.0
    %50 = vmatpush.msra.mxu0 %v28
    %51 = vmatpush.msra.mxu0 %v27
    %52 = vmatpush.msra.mxu0 %v26
    %53 = vmatpush.msra.mxu0 %v25
    %54 = vmatmul.f32.gmra.mxu0 %v36
    %v55 = vpop.f32.mrf.mxu0
    %v56 = vadd.f32 0.0, %v55
    %57 = vdwg.mxu0
    %v58 = vmul.f32 %v56, 0.17677669
    %v59 = vld [vmem:[%s3] sm:$0xff]
    %v60 = vld [vmem:[%s3 + $0x8] sm:$0xff]
    %v61 = vld [vmem:[%s3 + $0x10] sm:$0xff]
    %v62 = vld [vmem:[%s3 + $0x18] sm:$0xff]
    %v63 = vld [vmem:[%s3 + $0x20] sm:$0xff]
    %v64 = vld [vmem:[%s3 + $0x28] sm:$0xff]
    %v65 = vld [vmem:[%s3 + $0x30] sm:$0xff]
    %v66 = vld [vmem:[%s3 + $0x38] sm:$0xff]
    %v68 = vsel %vm35, %v23, 0
    %v71 = vsel %vm35, %v24, 0
    %73 = vmatpush.msra.mxu0 0.0
    %74 = vmatpush.msra.mxu0 0.0
    %75 = vmatpush.msra.mxu0 0.0
    %76 = vmatpush.msra.mxu0 0.0
    %77 = vmatpush.msra.mxu0 0.0
    %78 = vmatpush.msra.mxu0 0.0
    %79 = vmatpush.msra.mxu0 0.0
    %80 = vmatpush.msra.mxu0 0.0
    %81 = vmatpush.msra.mxu0 0.0
    %82 = vmatpush.msra.mxu0 0.0
    %83 = vmatpush.msra.mxu0 0.0
    %84 = vmatpush.msra.mxu0 0.0
    %85 = vmatpush.msra.mxu0 %v65
    %86 = vmatpush.msra.mxu0 %v63
    %87 = vmatpush.msra.mxu0 %v61
    %88 = vmatpush.msra.mxu0 %v59
    %89 = vmatmul.f32.gmra.mxu0 %v68
    %v90 = vpop.f32.mrf.mxu0
    %v91 = vadd.f32 0.0, %v90
    %92 = vmatmul.f32.gmra.mxu0 %v71
    %v93 = vpop.f32.mrf.mxu0
    %v94 = vadd.f32 0.0, %v93
    %95 = vdwg.mxu0
    %96 = vmatpush.msra.mxu0 0.0
    %97 = vmatpush.msra.mxu0 0.0
    %98 = vmatpush.msra.mxu0 0.0
    %99 = vmatpush.msra.mxu0 0.0
    %100 = vmatpush.msra.mxu0 0.0
    %101 = vmatpush.msra.mxu0 0.0
    %102 = vmatpush.msra.mxu0 0.0
    %103 = vmatpush.msra.mxu0 0.0
    %104 = vmatpush.msra.mxu0 0.0
    %105 = vmatpush.msra.mxu0 0.0
    %106 = vmatpush.msra.mxu0 0.0
    %107 = vmatpush.msra.mxu0 0.0
    %108 = vmatpush.msra.mxu0 %v66
    %109 = vmatpush.msra.mxu0 %v64
    %110 = vmatpush.msra.mxu0 %v62
    %111 = vmatpush.msra.mxu0 %v60
    %112 = vmatmul.f32.gmra.mxu0 %v68
    %v113 = vpop.f32.mrf.mxu0
    %v114 = vadd.f32 0.0, %v113
    %115 = vmatmul.f32.gmra.mxu0 %v71
    %v116 = vpop.f32.mrf.mxu0
    %v117 = vadd.f32 0.0, %v116
    %118 = vdwg.mxu0
    %v120 = vrot.slane %v58, 1
    %v121 = vsel %vm35, %v58, 0
    %v124 = vsel %vm35, %v91, 0
    %126 = vmatpush.xpose.msra.mxu0 0.0
    %127 = vmatpush.xpose.msra.mxu0 0.0
    %128 = vmatpush.xpose.msra.mxu0 0.0
    %129 = vmatpush.xpose.msra.mxu0 0.0
    %130 = vmatpush.xpose.msra.mxu0 0.0
    %131 = vmatpush.xpose.msra.mxu0 0.0
    %132 = vmatpush.xpose.msra.mxu0 0.0
    %133 = vmatpush.xpose.msra.mxu0 0.0
    %134 = vmatpush.xpose.msra.mxu0 0.0
    %135 = vmatpush.xpose.msra.mxu0 0.0
    %136 = vmatpush.xpose.msra.mxu0 0.0
    %137 = vmatpush.xpose.msra.mxu0 0.0
    %138 = vmatpush.xpose.msra.mxu0 0.0
    %139 = vmatpush.xpose.msra.mxu0 0.0
    %140 = vmatpush.xpose.msra.mxu0 0.0
    %141 = vmatpush.xpose.msra.mxu0 %v124
    %142 = vmatmul.f32.gmra.mxu0 %v121
    %v143 = vpop.f32.mrf.mxu0
    %v144 = vadd.f32 0.0, %v143
    %145 = vdwg.mxu0
    %v146 = vsel %vm35, %v120, 0
    %v149 = vsel %vm35, %v94, 0
    %151 = vmatpush.xpose.msra.mxu0 0.0
    %152 = vmatpush.xpose.msra.mxu0 0.0
    %153 = vmatpush.xpose.msra.mxu0 0.0
    %154 = vmatpush.xpose.msra.mxu0 0.0
    %155 = vmatpush.xpose.msra.mxu0 0.0
    %156 = vmatpush.xpose.msra.mxu0 0.0
    %157 = vmatpush.xpose.msra.mxu0 0.0
    %158 = vmatpush.xpose.msra.mxu0 0.0
    %159 = vmatpush.xpose.msra.mxu0 0.0
    %160 = vmatpush.xpose.msra.mxu0 0.0
    %161 = vmatpush.xpose.msra.mxu0 0.0
    %162 = vmatpush.xpose.msra.mxu0 0.0
    %163 = vmatpush.xpose.msra.mxu0 0.0
    %164 = vmatpush.xpose.msra.mxu0 0.0
    %165 = vmatpush.xpose.msra.mxu0 0.0
    %166 = vmatpush.xpose.msra.mxu0 %v149
    %167 = vmatmul.f32.gmra.mxu0 %v146
    %v168 = vpop.f32.mrf.mxu0
    %v169 = vadd.f32 0.0, %v168
    %170 = vdwg.mxu0
    %vm171 = vcmask 57344
    %v172 = vsel %vm171, %v144, -inf
    %173 = vmax.xlane.f32.xlu0 %v172
    %v174 = vpop.xlane.xlu0 %173
    %v175 = vsel %vm171, %v169, -inf
    %176 = vmax.xlane.f32.xlu0 %v175
    %v177 = vpop.xlane.xlu0 %176
    %v178 = vsub.f32 %v144, %v174
    %v179 = vsub.f32 %v169, %v177
    %v180 = vmul.f32 %v178, 1.442695
    %v181 = vpow.pop %v180
    %v182 = vmul.f32 %v179, 1.442695
    %v183 = vpow.pop %v182
    %v184 = vsel %vm171, %v181, 0.0
    %185 = vadd.xlane.f32.xlu0 %v184
    %v186 = vpop.xlane.xlu0 %185
    %v187 = vsel %vm171, %v183, 0.0
    %188 = vadd.xlane.f32.xlu0 %v187
    %v189 = vpop.xlane.xlu0 %188
    %v190 = vrcp.pop %v186
    %v191 = vmul.f32 %v186, %v190
    %v192 = vsub.f32 1.0, %v191
    %v193 = vmul.f32 %v190, %v192
    %v194 = vadd.f32 %v190, %v193
    %vm195 = vweird.f32 %v186
    %vm196 = vweird.f32 %v190
    %vm197 = vmor %vm195, %vm196
    %v198 = vsel %vm197, %v190, %v194
    %v199 = vand.u32 2147483647, %v186
    %vm200 = vcmp.eq.f32.partialorder %v199, 8.507059e+37
    %v201 = vand.u32 %v186, 2147483648
    %v202 = vor.u32 1.1754944e-38, %v201
    %v203 = vsel %vm200, %v202, %v198
    %v204 = vmul.f32 %v181, %v203
    %v205 = vrcp.pop %v189
    %v206 = vmul.f32 %v189, %v205
    %v207 = vsub.f32 1.0, %v206
    %v208 = vmul.f32 %v205, %v207
    %v209 = vadd.f32 %v205, %v208
    %vm210 = vweird.f32 %v189
    %vm211 = vweird.f32 %v205
    %vm212 = vmor %vm210, %vm211
    %v213 = vsel %vm212, %v205, %v209
    %v214 = vand.u32 2147483647, %v189
    %vm215 = vcmp.eq.f32.partialorder %v214, 8.507059e+37
    %v216 = vand.u32 %v189, 2147483648
    %v217 = vor.u32 1.1754944e-38, %v216
    %v218 = vsel %vm215, %v217, %v213
    %v219 = vmul.f32 %v183, %v218
    %vm220 = vcmask 64512
    %v222 = vsel %vm220, %v204, 0
    %224 = vmatpush.msra.mxu0 0.0
    %225 = vmatpush.msra.mxu0 0.0
    %226 = vmatpush.msra.mxu0 0.0
    %227 = vmatpush.msra.mxu0 0.0
    %228 = vmatpush.msra.mxu0 0.0
    %229 = vmatpush.msra.mxu0 0.0
    %230 = vmatpush.msra.mxu0 0.0
    %231 = vmatpush.msra.mxu0 0.0
    %232 = vmatpush.msra.mxu0 0.0
    %233 = vmatpush.msra.mxu0 0.0
    %234 = vmatpush.msra.mxu0 0.0
    %235 = vmatpush.msra.mxu0 0.0
    %236 = vmatpush.msra.mxu0 0.0
    %237 = vmatpush.msra.mxu0 0.0
    %238 = vmatpush.msra.mxu0 0.0
    %239 = vmatpush.msra.mxu0 %v114
    %240 = vmatmul.f32.gmra.mxu0 %v222
    %v241 = vpop.f32.mrf.mxu0
    %v242 = vadd.f32 0.0, %v241
    %243 = vdwg.mxu0
    %v245 = vsel %vm220, %v219, 0
    %247 = vmatpush.msra.mxu0 0.0
    %248 = vmatpush.msra.mxu0 0.0
    %249 = vmatpush.msra.mxu0 0.0
    %250 = vmatpush.msra.mxu0 0.0
    %251 = vmatpush.msra.mxu0 0.0
    %252 = vmatpush.msra.mxu0 0.0
    %253 = vmatpush.msra.mxu0 0.0
    %254 = vmatpush.msra.mxu0 0.0
    %255 = vmatpush.msra.mxu0 0.0
    %256 = vmatpush.msra.mxu0 0.0
    %257 = vmatpush.msra.mxu0 0.0
    %258 = vmatpush.msra.mxu0 0.0
    %259 = vmatpush.msra.mxu0 0.0
    %260 = vmatpush.msra.mxu0 0.0
    %261 = vmatpush.msra.mxu0 0.0
    %262 = vmatpush.msra.mxu0 %v117
    %263 = vmatmul.f32.gmra.mxu0 %v245
    %v264 = vpop.f32.mrf.mxu0
    %v265 = vadd.f32 0.0, %v264
    %266 = vdwg.mxu0
    %v267 = vperm.slane %v58, 0
    %268 = vrot.lane.b32.xlu0 %v267, 96
    %v269 = vpop.permute.xlu0 %268
    %270 = vrot.lane.b32.xlu0 %v91, 96
    %v271 = vpop.permute.xlu0 %270
    %v272 = vsel %vm35, %v269, 0
    %v274 = vsel %vm35, %v271, 0
    %276 = vmatpush.xpose.msra.mxu0 0.0
    %277 = vmatpush.xpose.msra.mxu0 0.0
    %278 = vmatpush.xpose.msra.mxu0 0.0
    %279 = vmatpush.xpose.msra.mxu0 0.0
    %280 = vmatpush.xpose.msra.mxu0 0.0
    %281 = vmatpush.xpose.msra.mxu0 0.0
    %282 = vmatpush.xpose.msra.mxu0 0.0
    %283 = vmatpush.xpose.msra.mxu0 0.0
    %284 = vmatpush.xpose.msra.mxu0 0.0
    %285 = vmatpush.xpose.msra.mxu0 0.0
    %286 = vmatpush.xpose.msra.mxu0 0.0
    %287 = vmatpush.xpose.msra.mxu0 0.0
    %288 = vmatpush.xpose.msra.mxu0 0.0
    %289 = vmatpush.xpose.msra.mxu0 0.0
    %290 = vmatpush.xpose.msra.mxu0 0.0
    %291 = vmatpush.xpose.msra.mxu0 %v274
    %292 = vmatmul.f32.gmra.mxu0 %v272
    %v293 = vpop.f32.mrf.mxu0
    %v294 = vadd.f32 0.0, %v293
    %295 = vdwg.mxu0
    %v296 = vperm.slane %v120, 0
    %297 = vrot.lane.b32.xlu0 %v296, 96
    %v298 = vpop.permute.xlu0 %297
    %299 = vrot.lane.b32.xlu0 %v94, 96
    %v300 = vpop.permute.xlu0 %299
    %v301 = vsel %vm35, %v298, 0
    %v303 = vsel %vm35, %v300, 0
    %305 = vmatpush.xpose.msra.mxu0 0.0
    %306 = vmatpush.xpose.msra.mxu0 0.0
    %307 = vmatpush.xpose.msra.mxu0 0.0
    %308 = vmatpush.xpose.msra.mxu0 0.0
    %309 = vmatpush.xpose.msra.mxu0 0.0
    %310 = vmatpush.xpose.msra.mxu0 0.0
    %311 = vmatpush.xpose.msra.mxu0 0.0
    %312 = vmatpush.xpose.msra.mxu0 0.0
    %313 = vmatpush.xpose.msra.mxu0 0.0
    %314 = vmatpush.xpose.msra.mxu0 0.0
    %315 = vmatpush.xpose.msra.mxu0 0.0
    %316 = vmatpush.xpose.msra.mxu0 0.0
    %317 = vmatpush.xpose.msra.mxu0 0.0
    %318 = vmatpush.xpose.msra.mxu0 0.0
    %319 = vmatpush.xpose.msra.mxu0 0.0
    %320 = vmatpush.xpose.msra.mxu0 %v303
    %321 = vmatmul.f32.gmra.mxu0 %v301
    %v322 = vpop.f32.mrf.mxu0
    %v323 = vadd.f32 0.0, %v322
    %324 = vdwg.mxu0
    %v325 = vsel %vm171, %v294, -inf
    %326 = vmax.xlane.f32.xlu0 %v325
    %v327 = vpop.xlane.xlu0 %326
    %v328 = vsel %vm171, %v323, -inf
    %329 = vmax.xlane.f32.xlu0 %v328
    %v330 = vpop.xlane.xlu0 %329
    %v331 = vsub.f32 %v294, %v327
    %v332 = vsub.f32 %v323, %v330
    %v333 = vmul.f32 %v331, 1.442695
    %v334 = vpow.pop %v333
    %v335 = vmul.f32 %v332, 1.442695
    %v336 = vpow.pop %v335
    %v337 = vsel %vm171, %v334, 0.0
    %338 = vadd.xlane.f32.xlu0 %v337
    %v339 = vpop.xlane.xlu0 %338
    %v340 = vsel %vm171, %v336, 0.0
    %341 = vadd.xlane.f32.xlu0 %v340
    %v342 = vpop.xlane.xlu0 %341
    %v343 = vrcp.pop %v339
    %v344 = vmul.f32 %v339, %v343
    %v345 = vsub.f32 1.0, %v344
    %v346 = vmul.f32 %v343, %v345
    %v347 = vadd.f32 %v343, %v346
    %vm348 = vweird.f32 %v339
    %vm349 = vweird.f32 %v343
    %vm350 = vmor %vm348, %vm349
    %v351 = vsel %vm350, %v343, %v347
    %v352 = vand.u32 2147483647, %v339
    %vm353 = vcmp.eq.f32.partialorder %v352, 8.507059e+37
    %v354 = vand.u32 %v339, 2147483648
    %v355 = vor.u32 1.1754944e-38, %v354
    %v356 = vsel %vm353, %v355, %v351
    %v357 = vmul.f32 %v334, %v356
    %v358 = vrcp.pop %v342
    %v359 = vmul.f32 %v342, %v358
    %v360 = vsub.f32 1.0, %v359
    %v361 = vmul.f32 %v358, %v360
    %v362 = vadd.f32 %v358, %v361
    %vm363 = vweird.f32 %v342
    %vm364 = vweird.f32 %v358
    %vm365 = vmor %vm363, %vm364
    %v366 = vsel %vm365, %v358, %v362
    %v367 = vand.u32 2147483647, %v342
    %vm368 = vcmp.eq.f32.partialorder %v367, 8.507059e+37
    %v369 = vand.u32 %v342, 2147483648
    %v370 = vor.u32 1.1754944e-38, %v369
    %v371 = vsel %vm368, %v370, %v366
    %v372 = vmul.f32 %v336, %v371
    %374 = vrot.lane.b32.xlu0 %v114, 96
    %v375 = vpop.permute.xlu0 %374
    %v378 = vsel %vm220, %v357, 0
    %380 = vmatpush.msra.mxu0 0.0
    %381 = vmatpush.msra.mxu0 0.0
    %382 = vmatpush.msra.mxu0 0.0
    %383 = vmatpush.msra.mxu0 0.0
    %384 = vmatpush.msra.mxu0 0.0
    %385 = vmatpush.msra.mxu0 0.0
    %386 = vmatpush.msra.mxu0 0.0
    %387 = vmatpush.msra.mxu0 0.0
    %388 = vmatpush.msra.mxu0 0.0
    %389 = vmatpush.msra.mxu0 0.0
    %390 = vmatpush.msra.mxu0 0.0
    %391 = vmatpush.msra.mxu0 0.0
    %392 = vmatpush.msra.mxu0 0.0
    %393 = vmatpush.msra.mxu0 0.0
    %394 = vmatpush.msra.mxu0 0.0
    %395 = vmatpush.msra.mxu0 %v375
    %396 = vmatmul.f32.gmra.mxu0 %v378
    %v397 = vpop.f32.mrf.mxu0
    %v398 = vadd.f32 0.0, %v397
    %399 = vdwg.mxu0
    %401 = vrot.lane.b32.xlu0 %v117, 96
    %v402 = vpop.permute.xlu0 %401
    %v405 = vsel %vm220, %v372, 0
    %407 = vmatpush.msra.mxu0 0.0
    %408 = vmatpush.msra.mxu0 0.0
    %409 = vmatpush.msra.mxu0 0.0
    %410 = vmatpush.msra.mxu0 0.0
    %411 = vmatpush.msra.mxu0 0.0
    %412 = vmatpush.msra.mxu0 0.0
    %413 = vmatpush.msra.mxu0 0.0
    %414 = vmatpush.msra.mxu0 0.0
    %415 = vmatpush.msra.mxu0 0.0
    %416 = vmatpush.msra.mxu0 0.0
    %417 = vmatpush.msra.mxu0 0.0
    %418 = vmatpush.msra.mxu0 0.0
    %419 = vmatpush.msra.mxu0 0.0
    %420 = vmatpush.msra.mxu0 0.0
    %421 = vmatpush.msra.mxu0 0.0
    %422 = vmatpush.msra.mxu0 %v402
    %423 = vmatmul.f32.gmra.mxu0 %v405
    %v424 = vpop.f32.mrf.mxu0
    %v425 = vadd.f32 0.0, %v424
    %426 = vdwg.mxu0
    %427 = vrot.lane.b32.xlu0 %v267, 64
    %v428 = vpop.permute.xlu0 %427
    %429 = vrot.lane.b32.xlu0 %v91, 64
    %v430 = vpop.permute.xlu0 %429
    %v431 = vsel %vm35, %v428, 0
    %v433 = vsel %vm35, %v430, 0
    %435 = vmatpush.xpose.msra.mxu0 0.0
    %436 = vmatpush.xpose.msra.mxu0 0.0
    %437 = vmatpush.xpose.msra.mxu0 0.0
    %438 = vmatpush.xpose.msra.mxu0 0.0
    %439 = vmatpush.xpose.msra.mxu0 0.0
    %440 = vmatpush.xpose.msra.mxu0 0.0
    %441 = vmatpush.xpose.msra.mxu0 0.0
    %442 = vmatpush.xpose.msra.mxu0 0.0
    %443 = vmatpush.xpose.msra.mxu0 0.0
    %444 = vmatpush.xpose.msra.mxu0 0.0
    %445 = vmatpush.xpose.msra.mxu0 0.0
    %446 = vmatpush.xpose.msra.mxu0 0.0
    %447 = vmatpush.xpose.msra.mxu0 0.0
    %448 = vmatpush.xpose.msra.mxu0 0.0
    %449 = vmatpush.xpose.msra.mxu0 0.0
    %450 = vmatpush.xpose.msra.mxu0 %v433
    %451 = vmatmul.f32.gmra.mxu0 %v431
    %v452 = vpop.f32.mrf.mxu0
    %v453 = vadd.f32 0.0, %v452
    %454 = vdwg.mxu0
    %455 = vrot.lane.b32.xlu0 %v296, 64
    %v456 = vpop.permute.xlu0 %455
    %457 = vrot.lane.b32.xlu0 %v94, 64
    %v458 = vpop.permute.xlu0 %457
    %v459 = vsel %vm35, %v456, 0
    %v461 = vsel %vm35, %v458, 0
    %463 = vmatpush.xpose.msra.mxu0 0.0
    %464 = vmatpush.xpose.msra.mxu0 0.0
    %465 = vmatpush.xpose.msra.mxu0 0.0
    %466 = vmatpush.xpose.msra.mxu0 0.0
    %467 = vmatpush.xpose.msra.mxu0 0.0
    %468 = vmatpush.xpose.msra.mxu0 0.0
    %469 = vmatpush.xpose.msra.mxu0 0.0
    %470 = vmatpush.xpose.msra.mxu0 0.0
    %471 = vmatpush.xpose.msra.mxu0 0.0
    %472 = vmatpush.xpose.msra.mxu0 0.0
    %473 = vmatpush.xpose.msra.mxu0 0.0
    %474 = vmatpush.xpose.msra.mxu0 0.0
    %475 = vmatpush.xpose.msra.mxu0 0.0
    %476 = vmatpush.xpose.msra.mxu0 0.0
    %477 = vmatpush.xpose.msra.mxu0 0.0
    %478 = vmatpush.xpose.msra.mxu0 %v461
    %479 = vmatmul.f32.gmra.mxu0 %v459
    %v480 = vpop.f32.mrf.mxu0
    %v481 = vadd.f32 0.0, %v480
    %482 = vdwg.mxu0
    %v483 = vsel %vm171, %v453, -inf
    %484 = vmax.xlane.f32.xlu0 %v483
    %v485 = vpop.xlane.xlu0 %484
    %v486 = vsel %vm171, %v481, -inf
    %487 = vmax.xlane.f32.xlu0 %v486
    %v488 = vpop.xlane.xlu0 %487
    %v489 = vsub.f32 %v453, %v485
    %v490 = vsub.f32 %v481, %v488
    %v491 = vmul.f32 %v489, 1.442695
    %v492 = vpow.pop %v491
    %v493 = vmul.f32 %v490, 1.442695
    %v494 = vpow.pop %v493
    %v495 = vsel %vm171, %v492, 0.0
    %496 = vadd.xlane.f32.xlu0 %v495
    %v497 = vpop.xlane.xlu0 %496
    %v498 = vsel %vm171, %v494, 0.0
    %499 = vadd.xlane.f32.xlu0 %v498
    %v500 = vpop.xlane.xlu0 %499
    %v501 = vrcp.pop %v497
    %v502 = vmul.f32 %v497, %v501
    %v503 = vsub.f32 1.0, %v502
    %v504 = vmul.f32 %v501, %v503
    %v505 = vadd.f32 %v501, %v504
    %vm506 = vweird.f32 %v497
    %vm507 = vweird.f32 %v501
    %vm508 = vmor %vm506, %vm507
    %v509 = vsel %vm508, %v501, %v505
    %v510 = vand.u32 2147483647, %v497
    %vm511 = vcmp.eq.f32.partialorder %v510, 8.507059e+37
    %v512 = vand.u32 %v497, 2147483648
    %v513 = vor.u32 1.1754944e-38, %v512
    %v514 = vsel %vm511, %v513, %v509
    %v515 = vmul.f32 %v492, %v514
    %v516 = vrcp.pop %v500
    %v517 = vmul.f32 %v500, %v516
    %v518 = vsub.f32 1.0, %v517
    %v519 = vmul.f32 %v516, %v518
    %v520 = vadd.f32 %v516, %v519
    %vm521 = vweird.f32 %v500
    %vm522 = vweird.f32 %v516
    %vm523 = vmor %vm521, %vm522
    %v524 = vsel %vm523, %v516, %v520
    %v525 = vand.u32 2147483647, %v500
    %vm526 = vcmp.eq.f32.partialorder %v525, 8.507059e+37
    %v527 = vand.u32 %v500, 2147483648
    %v528 = vor.u32 1.1754944e-38, %v527
    %v529 = vsel %vm526, %v528, %v524
    %v530 = vmul.f32 %v494, %v529
    %531 = vrot.lane.b32.xlu0 %v114, 64
    %v532 = vpop.permute.xlu0 %531
    %v535 = vsel %vm220, %v515, 0
    %537 = vmatpush.msra.mxu0 0.0
    %538 = vmatpush.msra.mxu0 0.0
    %539 = vmatpush.msra.mxu0 0.0
    %540 = vmatpush.msra.mxu0 0.0
    %541 = vmatpush.msra.mxu0 0.0
    %542 = vmatpush.msra.mxu0 0.0
    %543 = vmatpush.msra.mxu0 0.0
    %544 = vmatpush.msra.mxu0 0.0
    %545 = vmatpush.msra.mxu0 0.0
    %546 = vmatpush.msra.mxu0 0.0
    %547 = vmatpush.msra.mxu0 0.0
    %548 = vmatpush.msra.mxu0 0.0
    %549 = vmatpush.msra.mxu0 0.0
    %550 = vmatpush.msra.mxu0 0.0
    %551 = vmatpush.msra.mxu0 0.0
    %552 = vmatpush.msra.mxu0 %v532
    %553 = vmatmul.f32.gmra.mxu0 %v535
    %v554 = vpop.f32.mrf.mxu0
    %v555 = vadd.f32 0.0, %v554
    %556 = vdwg.mxu0
    %557 = vrot.lane.b32.xlu0 %v117, 64
    %v558 = vpop.permute.xlu0 %557
    %v561 = vsel %vm220, %v530, 0
    %563 = vmatpush.msra.mxu0 0.0
    %564 = vmatpush.msra.mxu0 0.0
    %565 = vmatpush.msra.mxu0 0.0
    %566 = vmatpush.msra.mxu0 0.0
    %567 = vmatpush.msra.mxu0 0.0
    %568 = vmatpush.msra.mxu0 0.0
    %569 = vmatpush.msra.mxu0 0.0
    %570 = vmatpush.msra.mxu0 0.0
    %571 = vmatpush.msra.mxu0 0.0
    %572 = vmatpush.msra.mxu0 0.0
    %573 = vmatpush.msra.mxu0 0.0
    %574 = vmatpush.msra.mxu0 0.0
    %575 = vmatpush.msra.mxu0 0.0
    %576 = vmatpush.msra.mxu0 0.0
    %577 = vmatpush.msra.mxu0 0.0
    %578 = vmatpush.msra.mxu0 %v558
    %579 = vmatmul.f32.gmra.mxu0 %v561
    %v580 = vpop.f32.mrf.mxu0
    %v581 = vadd.f32 0.0, %v580
    %582 = vdwg.mxu0
    %583 = vrot.lane.b32.xlu0 %v267, 32
    %v584 = vpop.permute.xlu0 %583
    %585 = vrot.lane.b32.xlu0 %v91, 32
    %v586 = vpop.permute.xlu0 %585
    %v587 = vsel %vm35, %v584, 0
    %v589 = vsel %vm35, %v586, 0
    %591 = vmatpush.xpose.msra.mxu0 0.0
    %592 = vmatpush.xpose.msra.mxu0 0.0
    %593 = vmatpush.xpose.msra.mxu0 0.0
    %594 = vmatpush.xpose.msra.mxu0 0.0
    %595 = vmatpush.xpose.msra.mxu0 0.0
    %596 = vmatpush.xpose.msra.mxu0 0.0
    %597 = vmatpush.xpose.msra.mxu0 0.0
    %598 = vmatpush.xpose.msra.mxu0 0.0
    %599 = vmatpush.xpose.msra.mxu0 0.0
    %600 = vmatpush.xpose.msra.mxu0 0.0
    %601 = vmatpush.xpose.msra.mxu0 0.0
    %602 = vmatpush.xpose.msra.mxu0 0.0
    %603 = vmatpush.xpose.msra.mxu0 0.0
    %604 = vmatpush.xpose.msra.mxu0 0.0
    %605 = vmatpush.xpose.msra.mxu0 0.0
    %606 = vmatpush.xpose.msra.mxu0 %v589
    %607 = vmatmul.f32.gmra.mxu0 %v587
    %v608 = vpop.f32.mrf.mxu0
    %v609 = vadd.f32 0.0, %v608
    %610 = vdwg.mxu0
    %611 = vrot.lane.b32.xlu0 %v296, 32
    %v612 = vpop.permute.xlu0 %611
    %613 = vrot.lane.b32.xlu0 %v94, 32
    %v614 = vpop.permute.xlu0 %613
    %v615 = vsel %vm35, %v612, 0
    %v617 = vsel %vm35, %v614, 0
    %619 = vmatpush.xpose.msra.mxu0 0.0
    %620 = vmatpush.xpose.msra.mxu0 0.0
    %621 = vmatpush.xpose.msra.mxu0 0.0
    %622 = vmatpush.xpose.msra.mxu0 0.0
    %623 = vmatpush.xpose.msra.mxu0 0.0
    %624 = vmatpush.xpose.msra.mxu0 0.0
    %625 = vmatpush.xpose.msra.mxu0 0.0
    %626 = vmatpush.xpose.msra.mxu0 0.0
    %627 = vmatpush.xpose.msra.mxu0 0.0
    %628 = vmatpush.xpose.msra.mxu0 0.0
    %629 = vmatpush.xpose.msra.mxu0 0.0
    %630 = vmatpush.xpose.msra.mxu0 0.0
    %631 = vmatpush.xpose.msra.mxu0 0.0
    %632 = vmatpush.xpose.msra.mxu0 0.0
    %633 = vmatpush.xpose.msra.mxu0 0.0
    %634 = vmatpush.xpose.msra.mxu0 %v617
    %635 = vmatmul.f32.gmra.mxu0 %v615
    %v636 = vpop.f32.mrf.mxu0
    %v637 = vadd.f32 0.0, %v636
    %638 = vdwg.mxu0
    %v639 = vsel %vm171, %v609, -inf
    %640 = vmax.xlane.f32.xlu0 %v639
    %v641 = vpop.xlane.xlu0 %640
    %v642 = vsel %vm171, %v637, -inf
    %643 = vmax.xlane.f32.xlu0 %v642
    %v644 = vpop.xlane.xlu0 %643
    %v645 = vsub.f32 %v609, %v641
    %v646 = vsub.f32 %v637, %v644
    %v647 = vmul.f32 %v645, 1.442695
    %v648 = vpow.pop %v647
    %v649 = vmul.f32 %v646, 1.442695
    %v650 = vpow.pop %v649
    %v651 = vsel %vm171, %v648, 0.0
    %652 = vadd.xlane.f32.xlu0 %v651
    %v653 = vpop.xlane.xlu0 %652
    %v654 = vsel %vm171, %v650, 0.0
    %655 = vadd.xlane.f32.xlu0 %v654
    %v656 = vpop.xlane.xlu0 %655
    %v657 = vrcp.pop %v653
    %v658 = vmul.f32 %v653, %v657
    %v659 = vsub.f32 1.0, %v658
    %v660 = vmul.f32 %v657, %v659
    %v661 = vadd.f32 %v657, %v660
    %vm662 = vweird.f32 %v653
    %vm663 = vweird.f32 %v657
    %vm664 = vmor %vm662, %vm663
    %v665 = vsel %vm664, %v657, %v661
    %v666 = vand.u32 2147483647, %v653
    %vm667 = vcmp.eq.f32.partialorder %v666, 8.507059e+37
    %v668 = vand.u32 %v653, 2147483648
    %v669 = vor.u32 1.1754944e-38, %v668
    %v670 = vsel %vm667, %v669, %v665
    %v671 = vmul.f32 %v648, %v670
    %v672 = vrcp.pop %v656
    %v673 = vmul.f32 %v656, %v672
    %v674 = vsub.f32 1.0, %v673
    %v675 = vmul.f32 %v672, %v674
    %v676 = vadd.f32 %v672, %v675
    %vm677 = vweird.f32 %v656
    %vm678 = vweird.f32 %v672
    %vm679 = vmor %vm677, %vm678
    %v680 = vsel %vm679, %v672, %v676
    %v681 = vand.u32 2147483647, %v656
    %vm682 = vcmp.eq.f32.partialorder %v681, 8.507059e+37
    %v683 = vand.u32 %v656, 2147483648
    %v684 = vor.u32 1.1754944e-38, %v683
    %v685 = vsel %vm682, %v684, %v680
    %v686 = vmul.f32 %v650, %v685
    %687 = vrot.lane.b32.xlu0 %v114, 32
    %v688 = vpop.permute.xlu0 %687
    %v691 = vsel %vm220, %v671, 0
    %693 = vmatpush.msra.mxu0 0.0
    %694 = vmatpush.msra.mxu0 0.0
    %695 = vmatpush.msra.mxu0 0.0
    %696 = vmatpush.msra.mxu0 0.0
    %697 = vmatpush.msra.mxu0 0.0
    %698 = vmatpush.msra.mxu0 0.0
    %699 = vmatpush.msra.mxu0 0.0
    %700 = vmatpush.msra.mxu0 0.0
    %701 = vmatpush.msra.mxu0 0.0
    %702 = vmatpush.msra.mxu0 0.0
    %703 = vmatpush.msra.mxu0 0.0
    %704 = vmatpush.msra.mxu0 0.0
    %705 = vmatpush.msra.mxu0 0.0
    %706 = vmatpush.msra.mxu0 0.0
    %707 = vmatpush.msra.mxu0 0.0
    %708 = vmatpush.msra.mxu0 %v688
    %709 = vmatmul.f32.gmra.mxu0 %v691
    %v710 = vpop.f32.mrf.mxu0
    %v711 = vadd.f32 0.0, %v710
    %712 = vdwg.mxu0
    %713 = vrot.lane.b32.xlu0 %v117, 32
    %v714 = vpop.permute.xlu0 %713
    %v717 = vsel %vm220, %v686, 0
    %719 = vmatpush.msra.mxu0 0.0
    %720 = vmatpush.msra.mxu0 0.0
    %721 = vmatpush.msra.mxu0 0.0
    %722 = vmatpush.msra.mxu0 0.0
    %723 = vmatpush.msra.mxu0 0.0
    %724 = vmatpush.msra.mxu0 0.0
    %725 = vmatpush.msra.mxu0 0.0
    %726 = vmatpush.msra.mxu0 0.0
    %727 = vmatpush.msra.mxu0 0.0
    %728 = vmatpush.msra.mxu0 0.0
    %729 = vmatpush.msra.mxu0 0.0
    %730 = vmatpush.msra.mxu0 0.0
    %731 = vmatpush.msra.mxu0 0.0
    %732 = vmatpush.msra.mxu0 0.0
    %733 = vmatpush.msra.mxu0 0.0
    %734 = vmatpush.msra.mxu0 %v714
    %735 = vmatmul.f32.gmra.mxu0 %v717
    %v736 = vpop.f32.mrf.mxu0
    %v737 = vadd.f32 0.0, %v736
    %738 = vdwg.mxu0
    %741 = vrot.lane.b32.xlu0 %v398, 32
    %v742 = vpop.permute.xlu0 %741
    %743 = vrot.lane.b32.xlu0 %v425, 32
    %v744 = vpop.permute.xlu0 %743
    %749 = vrot.lane.b32.xlu0 %v555, 64
    %v750 = vpop.permute.xlu0 %749
    %751 = vrot.lane.b32.xlu0 %v581, 64
    %v752 = vpop.permute.xlu0 %751
    %757 = vrot.lane.b32.xlu0 %v711, 96
    %v758 = vpop.permute.xlu0 %757
    %759 = vrot.lane.b32.xlu0 %v737, 96
    %v760 = vpop.permute.xlu0 %759
    %v763 = vsel %vm35, %v242, %v742
    %v764 = vsel %vm35, %v265, %v744
    %vm765 = vcmask 523264
    %v766 = vsel %vm765, %v763, %v750
    %v767 = vsel %vm765, %v764, %v752
    %vm768 = vcmask 785408
    %v769 = vsel %vm768, %v766, %v758
    %v770 = vsel %vm768, %v767, %v760
    %v771 = vld [vmem:[%s4] sm:$0xff]
    %v772 = vld [vmem:[%s4 + $0x8] sm:$0xff]
    %v773 = vld [vmem:[%s4 + $0x10] sm:$0xff]
    %v774 = vld [vmem:[%s4 + $0x18] sm:$0xff]
    %v775 = vld [vmem:[%s4 + $0x20] sm:$0xff]
    %v776 = vld [vmem:[%s4 + $0x28] sm:$0xff]
    %v777 = vld [vmem:[%s4 + $0x30] sm:$0xff]
    %v778 = vld [vmem:[%s4 + $0x38] sm:$0xff]
    %v779 = vld [vmem:[%s4 + $0x40] sm:$0xff]
    %v780 = vld [vmem:[%s4 + $0x48] sm:$0xff]
    %v781 = vld [vmem:[%s4 + $0x50] sm:$0xff]
    %v782 = vld [vmem:[%s4 + $0x58] sm:$0xff]
    %v783 = vld [vmem:[%s4 + $0x60] sm:$0xff]
    %v784 = vld [vmem:[%s4 + $0x68] sm:$0xff]
    %v785 = vld [vmem:[%s4 + $0x70] sm:$0xff]
    %v786 = vld [vmem:[%s4 + $0x78] sm:$0xff]
    %v789 = vrot.slane %v770, 7
    %vm790 = vcmask 1041409
    %v791 = vsel %vm790, %v789, %v769
    %793 = vmatpush.msra.mxu0 %v786
    %794 = vmatpush.msra.mxu0 %v785
    %795 = vmatpush.msra.mxu0 %v784
    %796 = vmatpush.msra.mxu0 %v783
    %797 = vmatpush.msra.mxu0 %v782
    %798 = vmatpush.msra.mxu0 %v781
    %799 = vmatpush.msra.mxu0 %v780
    %800 = vmatpush.msra.mxu0 %v779
    %801 = vmatpush.msra.mxu0 %v778
    %802 = vmatpush.msra.mxu0 %v777
    %803 = vmatpush.msra.mxu0 %v776
    %804 = vmatpush.msra.mxu0 %v775
    %805 = vmatpush.msra.mxu0 %v774
    %806 = vmatpush.msra.mxu0 %v773
    %807 = vmatpush.msra.mxu0 %v772
    %808 = vmatpush.msra.mxu0 %v771
    %809 = vmatmul.f32.gmra.mxu0 %v791
    %v810 = vpop.f32.mrf.mxu0
    %v811 = vadd.f32 0.0, %v810
    %812 = vdwg.mxu0
    %vm813 = vcmask 254976
    %814 = vst.msk [vmem:[#allocation2] sm:$0x3] %vm813, %v811
    // Predicated region
    $region22: #{tpu_custom_call.1} parent=1 // pred_check
      _
    $region23: #{tpu_custom_call.1} parent=1 // pred_check_branch
      %816 = sbr.rel (0) target = $region25
    $region24: #{tpu_custom_call.1} parent=1 // pred_region
      %818 = vsyncadd [#allocation3], 0
      %s820 = sshll.u32 [#allocation2], 4
      %s821 = int_to_ptr.vmem [resolvable:$true] %s820
      %s822 = sshll.u32 %s5, 4
      %s823 = int_to_ptr.hbm [resolvable:$true] %s822
      %825 = dma.vmem_to_hbm [thread:$0]  %s821, 32, %s823, [#allocation3]
    $region25: #{tpu_custom_call.1} parent=1 // pred_fallthru
      _
    // Predicated region
    $region26: #{tpu_custom_call.1} parent=1 // pred_check
      _
    $region27: #{tpu_custom_call.1} parent=1 // pred_check_branch
      %827 = sbr.rel (0) target = $region29
    $region28: #{tpu_custom_call.1} parent=1 // pred_region
      %829 = dma.done [#allocation3], 32
    $region29: #{tpu_custom_call.1} parent=1 // pred_fallthru
      _
    %830 = vsyncpa [#allocation3], 1

</llo_original>
